<compile_context>
chip_gen: v6e
topology: v6e:2x2x1
jax: 0.10.0
libtpu: 0.0.40
codegen_flags: <defaults>
</compile_context>

<pallas_src>
import jax
import jax.numpy as jnp
from jax.experimental import pallas as pl
from jax.experimental.pallas import tpu as pltpu


EPS = 1e-5
LANE = 128  # pad every feature axis to one full lane width


def _bn_fold(x, gamma, beta):
    """Train-mode BatchNorm1d folded into a single per-feature affine (f32).

    One-pass moments (E[x], E[x^2]); biased variance, eps=1e-5, matching
    PyTorch BatchNorm1d forward in .train() mode.
    """
    inv_n = 1.0 / x.shape[0]
    mu = jnp.sum(x, axis=0, keepdims=True) * inv_n
    ex2 = jnp.sum(x * x, axis=0, keepdims=True) * inv_n
    var = jnp.maximum(ex2 - mu * mu, 0.0)
    scale = gamma * jax.lax.rsqrt(var + EPS)      # rsqrt -> EUP slot
    shift = beta - mu * scale
    return x * scale + shift


def simsiam_kernel(h_ref, w_ref, vec_ref, out_ref):
    vec = vec_ref[...]      # (8, 128) f32: [g1, be1, g3, be3, gp1, bep1, pr_b2, 0]

    # ---- projection MLP (num_layers=2) ----
    # layer1: Linear (bias cancelled by BN) + BN + ReLU
    x = jnp.dot(h_ref[...].astype(jnp.bfloat16), w_ref[0],
                preferred_element_type=jnp.float32)
    x = jnp.maximum(_bn_fold(x, vec[0:1, :], vec[1:2, :]), 0.0)

    # layer3: Linear (bias cancelled by BN) + BN, no ReLU
    x = jnp.dot(x.astype(jnp.bfloat16), w_ref[1],
                preferred_element_type=jnp.float32)
    p = _bn_fold(x, vec[2:3, :], vec[3:4, :])

    # Store p NOW (unmasked 128-wide store drains while the MXU keeps working;
    # shortens p's live range through the prediction-MLP below).
    out_ref[:, 0:LANE] = p

    # ---- prediction MLP ----
    # layer1: Linear (bias cancelled by BN) + BN + ReLU
    y = jnp.dot(p.astype(jnp.bfloat16), w_ref[2],
                preferred_element_type=jnp.float32)
    y = jnp.maximum(_bn_fold(y, vec[4:5, :], vec[5:6, :]), 0.0)

    # layer2: Linear + bias, no BN / ReLU
    z = jnp.dot(y.astype(jnp.bfloat16), w_ref[3],
                preferred_element_type=jnp.float32) + vec[6:7, :]

    out_ref[:, LANE:2 * LANE] = z


def _pad_mat(w):
    return jnp.pad(w.astype(jnp.float32),
                   ((0, LANE - w.shape[0]), (0, LANE - w.shape[1])))


def _pad_vec(v):
    v = v.astype(jnp.float32).reshape(-1)
    return jnp.pad(v, (0, LANE - v.shape[0]))


def pack_simsiam_params(params):
    """Pack/pad the parameters ONCE (call at init / after each optimizer step).

    Zero-padding is exact: padded columns stay identically zero through
    Linear/BN/ReLU because gamma/beta/bias are zero-padded (scale=0, shift=0;
    eps>0 avoids NaN in rsqrt).
    """
    w_stack = jnp.stack([
        _pad_mat(params["pj_w1"]),
        _pad_mat(params["pj_w3"]),
        _pad_mat(params["pr_w1"]),
        _pad_mat(params["pr_w2"]),
    ]).astype(jnp.bfloat16)                     # (4, 128, 128) bf16 — MXU-native
    vec_stack = jnp.stack([
        _pad_vec(params["pj_g1"]), _pad_vec(params["pj_be1"]),
        _pad_vec(params["pj_g3"]), _pad_vec(params["pj_be3"]),
        _pad_vec(params["pr_g1"]), _pad_vec(params["pr_be1"]),
        _pad_vec(params["pr_b2"]),
        jnp.zeros((LANE,), jnp.float32),
    ])                                          # (8, 128) f32 — exactly one VMEM tile
    cluster_dim = params["pj_w3"].shape[1]
    return {"w": w_stack, "vec": vec_stack, "cluster_dim": cluster_dim}


def simsiam_forward(h, packed):
    B = h.shape[0]
    cluster_dim = packed["cluster_dim"]

    # Only the per-step activation is padded here; weights were packed once.
    h_pad = jnp.pad(h.astype(jnp.float32), ((0, 0), (0, LANE - h.shape[1])))

    # Everything is VMEM-resident (no grid): size the scoped VMEM limit from B,
    # capped at 64 MiB so the same sizing is valid on v7x.
    per_row_bytes = 6 * 1024           # h + live activations + bf16 copies + out
    vmem_limit = int(min(64 << 20, max(32 << 20, (1 << 20) + per_row_bytes * B)))

    vmem = pl.BlockSpec(memory_space=pltpu.MemorySpace.VMEM)
    out = pl.pallas_call(
        simsiam_kernel,
        out_shape=jax.ShapeDtypeStruct((B, 2 * LANE), jnp.float32),
        in_specs=[vmem, vmem, vmem],
        out_specs=vmem,
        compiler_params=pltpu.CompilerParams(vmem_limit_bytes=vmem_limit),
    )(h_pad, packed["w"], packed["vec"])

    p = out[:, :cluster_dim]
    z = out[:, LANE:LANE + cluster_dim]
    return p, z


# ----------------------------- test harness ---------------------------------

def _linear_params(key, fan_in, fan_out):
    # Deterministic synthetic init (shapes match nn.Linear(fan_in, fan_out)),
    # weights stored pre-transposed as [in_features, out_features].
    kw, kb = jax.random.split(key)
    bound = 1.0 / (fan_in ** 0.5)
    w = jax.random.uniform(kw, (fan_in, fan_out), jnp.float32, -bound, bound)
    b = jax.random.uniform(kb, (1, fan_out), jnp.float32, -bound, bound)
    return w, b


def make_params(key, in_features, projection_dim, cluster_dim, prediction_hidden_dim):
    ks = jax.random.split(key, 4)
    params = {}
    # projection_MLP layer1: Linear(in_features, projection_dim) + BN + ReLU
    params["pj_w1"], params["pj_b1"] = _linear_params(ks[0], in_features, projection_dim)
    params["pj_g1"] = jnp.ones((1, projection_dim), jnp.float32)
    params["pj_be1"] = jnp.zeros((1, projection_dim), jnp.float32)
    # projection_MLP layer3: Linear(projection_dim, cluster_dim) + BN
    params["pj_w3"], params["pj_b3"] = _linear_params(ks[1], projection_dim, cluster_dim)
    params["pj_g3"] = jnp.ones((1, cluster_dim), jnp.float32)
    params["pj_be3"] = jnp.zeros((1, cluster_dim), jnp.float32)
    # prediction_MLP layer1: Linear(cluster_dim, prediction_hidden_dim) + BN + ReLU
    params["pr_w1"], params["pr_b1"] = _linear_params(ks[2], cluster_dim, prediction_hidden_dim)
    params["pr_g1"] = jnp.ones((1, prediction_hidden_dim), jnp.float32)
    params["pr_be1"] = jnp.zeros((1, prediction_hidden_dim), jnp.float32)
    # prediction_MLP layer2: Linear(prediction_hidden_dim, cluster_dim), no BN / ReLU
    params["pr_w2"], params["pr_b2"] = _linear_params(ks[3], prediction_hidden_dim, cluster_dim)
    return params


def reference_forward_f32(h, params):
    # Full PyTorch-equivalent f32 math INCLUDING the pre-BN biases.
    def bn(x, g, b):
        mu = jnp.mean(x, axis=0, keepdims=True)
        var = jnp.mean((x - mu) ** 2, axis=0, keepdims=True)
        return (x - mu) * jax.lax.rsqrt(var + EPS) * g + b

    x = h @ params["pj_w1"] + params["pj_b1"]
    x = jnp.maximum(bn(x, params["pj_g1"], params["pj_be1"]), 0.0)
    x = x @ params["pj_w3"] + params["pj_b3"]
    p = bn(x, params["pj_g3"], params["pj_be3"])
    y = p @ params["pr_w1"] + params["pr_b1"]
    y = jnp.maximum(bn(y, params["pr_g1"], params["pr_be1"]), 0.0)
    z = y @ params["pr_w2"] + params["pr_b2"]
    return p, z


def reference_forward_bf16_policy(h, params):
    # Same precision policy as the kernel: bf16 matmul inputs, f32 accumulation,
    # f32 BN (one-pass moments), pre-BN biases dropped (exact for train-mode BN).
    def mm(a, w):
        return jnp.dot(a.astype(jnp.bfloat16), w.astype(jnp.bfloat16),
                       preferred_element_type=jnp.float32)

    def bn(x, g, b):
        mu = jnp.mean(x, axis=0, keepdims=True)
        var = jnp.maximum(jnp.mean(x * x, axis=0, keepdims=True) - mu * mu, 0.0)
        scale = g * jax.lax.rsqrt(var + EPS)
        return x * scale + (b - mu * scale)

    x = mm(h, params["pj_w1"])
    x = jnp.maximum(bn(x, params["pj_g1"], params["pj_be1"]), 0.0)
    x = mm(x, params["pj_w3"])
    p = bn(x, params["pj_g3"], params["pj_be3"])
    y = mm(p, params["pr_w1"])
    y = jnp.maximum(bn(y, params["pr_g1"], params["pr_be1"]), 0.0)
    z = mm(y, params["pr_w2"]) + params["pr_b2"]
    return p, z


if __name__ == "__main__":
    # Small shapes consistent with SimSiamModule(args):
    #   args.hidden_dim=32, args.projection_dim=64, args.cluster_hidden_dim=32,
    #   args.prediction_hidden_dim=16, args.projection_layers=2
    B = 8
    in_features = 32
    projection_dim = 64
    cluster_dim = 32
    prediction_hidden_dim = 16

    key = jax.random.PRNGKey(0)
    k_h, k_p = jax.random.split(key)
    h = jax.random.normal(k_h, (B, in_features), jnp.float32)
    params = make_params(k_p, in_features, projection_dim, cluster_dim, prediction_hidden_dim)

    packed = pack_simsiam_params(params)   # pack ONCE, reuse across steps
    p, z = simsiam_forward(h, packed)
    jax.block_until_ready((p, z))

    # Tight check against a reference with the SAME bf16-matmul precision policy
    # (verifies the kernel math, the BN fold and the bias-dropping algebra).
    p_bf, z_bf = reference_forward_bf16_policy(h, params)
    assert jnp.allclose(p, p_bf, rtol=2e-3, atol=2e-3), "p mismatch vs bf16-policy ref"
    assert jnp.allclose(z, z_bf, rtol=2e-3, atol=2e-3), "z mismatch vs bf16-policy ref"

    # Loose sanity check against the exact-f32 PyTorch-equivalent forward
    # (tolerance reflects the intentional bf16 MXU precision policy).
    p_ref, z_ref = reference_forward_f32(h, params)
    assert jnp.allclose(p, p_ref, rtol=1e-1, atol=1e-1), "p mismatch vs f32 ref"
    assert jnp.allclose(z, z_ref, rtol=1e-1, atol=1e-1), "z mismatch vs f32 ref"

    print("KERNEL_OK")
</pallas_src>

<mosaic_0001>
module attributes {stable_mosaic.version = 11 : i64} {
  func.func @simsiam_kernel(%arg0: memref<8x128xf32, #tpu.memory_space<vmem>>, %arg1: memref<4x128x128xbf16, #tpu.memory_space<vmem>>, %arg2: memref<8x128xf32, #tpu.memory_space<vmem>>, %arg3: memref<8x256xf32, #tpu.memory_space<vmem>>) attributes {dimension_semantics = [], scalar_prefetch = 0 : i64, scratch_operands = 0 : i64, tpu.core_type = #tpu.core_type<tc>} {
    %c0 = arith.constant 0 : index
    %c0_0 = arith.constant 0 : index
    %0 = vector.load %arg2[%c0, %c0_0] : memref<8x128xf32, #tpu.memory_space<vmem>>, vector<8x128xf32>
    %c0_1 = arith.constant 0 : index
    %c0_2 = arith.constant 0 : index
    %1 = vector.load %arg0[%c0_1, %c0_2] : memref<8x128xf32, #tpu.memory_space<vmem>>, vector<8x128xf32>
    %2 = arith.truncf %1 : vector<8x128xf32> to vector<8x128xbf16>
    %c0_3 = arith.constant 0 : index
    %c0_4 = arith.constant 0 : index
    %c0_5 = arith.constant 0 : index
    %3 = vector.load %arg1[%c0_3, %c0_4, %c0_5] : memref<4x128x128xbf16, #tpu.memory_space<vmem>>, vector<1x128x128xbf16>
    %4 = vector.shape_cast %3 : vector<1x128x128xbf16> to vector<128x128xbf16>
    %cst = arith.constant dense<0.000000e+00> : vector<8x128xf32>
    %5 = tpu.matmul %2, %4, %cst {dimension_numbers = #tpu.dot_dimension_numbers<[1], [0], [0], [1], [0, 0, 1, 1], [], []>} : vector<8x128xbf16>, vector<128x128xbf16>, vector<8x128xf32> -> vector<8x128xf32>
    %6 = vector.extract_strided_slice %0 {offsets = [0, 0], sizes = [1, 128], strides = [1, 1]} : vector<8x128xf32> to vector<1x128xf32>
    %7 = vector.extract_strided_slice %0 {offsets = [1, 0], sizes = [1, 128], strides = [1, 1]} : vector<8x128xf32> to vector<1x128xf32>
    %cst_6 = arith.constant dense<0.000000e+00> : vector<128xf32>
    %8 = vector.multi_reduction <add>, %5, %cst_6 [0] : vector<8x128xf32> to vector<128xf32>
    %9 = vector.shape_cast %8 : vector<128xf32> to vector<1x128xf32>
    %cst_7 = arith.constant 1.250000e-01 : f32
    %10 = vector.broadcast %cst_7 : f32 to vector<1x128xf32>
    %11 = arith.mulf %9, %10 : vector<1x128xf32>
    %12 = arith.mulf %5, %5 : vector<8x128xf32>
    %cst_8 = arith.constant dense<0.000000e+00> : vector<128xf32>
    %13 = vector.multi_reduction <add>, %12, %cst_8 [0] : vector<8x128xf32> to vector<128xf32>
    %14 = vector.shape_cast %13 : vector<128xf32> to vector<1x128xf32>
    %cst_9 = arith.constant 1.250000e-01 : f32
    %15 = vector.broadcast %cst_9 : f32 to vector<1x128xf32>
    %16 = arith.mulf %14, %15 : vector<1x128xf32>
    %17 = arith.mulf %11, %11 : vector<1x128xf32>
    %18 = arith.subf %16, %17 : vector<1x128xf32>
    %cst_10 = arith.constant 0.000000e+00 : f32
    %19 = vector.broadcast %cst_10 : f32 to vector<1x128xf32>
    %20 = arith.maximumf %18, %19 : vector<1x128xf32>
    %cst_11 = arith.constant 9.99999974E-6 : f32
    %21 = vector.broadcast %cst_11 : f32 to vector<1x128xf32>
    %22 = arith.addf %20, %21 : vector<1x128xf32>
    %23 = math.rsqrt %22 : vector<1x128xf32>
    %24 = arith.mulf %6, %23 : vector<1x128xf32>
    %25 = arith.mulf %11, %24 : vector<1x128xf32>
    %26 = arith.subf %7, %25 : vector<1x128xf32>
    %27 = vector.broadcast %24 : vector<1x128xf32> to vector<8x128xf32>
    %28 = arith.mulf %5, %27 : vector<8x128xf32>
    %29 = vector.broadcast %26 : vector<1x128xf32> to vector<8x128xf32>
    %30 = arith.addf %28, %29 : vector<8x128xf32>
    %cst_12 = arith.constant 0.000000e+00 : f32
    %31 = vector.broadcast %cst_12 : f32 to vector<8x128xf32>
    %32 = arith.maximumf %30, %31 : vector<8x128xf32>
    %33 = arith.truncf %32 : vector<8x128xf32> to vector<8x128xbf16>
    %c1 = arith.constant 1 : index
    %c0_13 = arith.constant 0 : index
    %c0_14 = arith.constant 0 : index
    %34 = vector.load %arg1[%c1, %c0_13, %c0_14] : memref<4x128x128xbf16, #tpu.memory_space<vmem>>, vector<1x128x128xbf16>
    %35 = vector.shape_cast %34 : vector<1x128x128xbf16> to vector<128x128xbf16>
    %cst_15 = arith.constant dense<0.000000e+00> : vector<8x128xf32>
    %36 = tpu.matmul %33, %35, %cst_15 {dimension_numbers = #tpu.dot_dimension_numbers<[1], [0], [0], [1], [0, 0, 1, 1], [], []>} : vector<8x128xbf16>, vector<128x128xbf16>, vector<8x128xf32> -> vector<8x128xf32>
    %37 = vector.extract_strided_slice %0 {offsets = [2, 0], sizes = [1, 128], strides = [1, 1]} : vector<8x128xf32> to vector<1x128xf32>
    %38 = vector.extract_strided_slice %0 {offsets = [3, 0], sizes = [1, 128], strides = [1, 1]} : vector<8x128xf32> to vector<1x128xf32>
    %cst_16 = arith.constant dense<0.000000e+00> : vector<128xf32>
    %39 = vector.multi_reduction <add>, %36, %cst_16 [0] : vector<8x128xf32> to vector<128xf32>
    %40 = vector.shape_cast %39 : vector<128xf32> to vector<1x128xf32>
    %cst_17 = arith.constant 1.250000e-01 : f32
    %41 = vector.broadcast %cst_17 : f32 to vector<1x128xf32>
    %42 = arith.mulf %40, %41 : vector<1x128xf32>
    %43 = arith.mulf %36, %36 : vector<8x128xf32>
    %cst_18 = arith.constant dense<0.000000e+00> : vector<128xf32>
    %44 = vector.multi_reduction <add>, %43, %cst_18 [0] : vector<8x128xf32> to vector<128xf32>
    %45 = vector.shape_cast %44 : vector<128xf32> to vector<1x128xf32>
    %cst_19 = arith.constant 1.250000e-01 : f32
    %46 = vector.broadcast %cst_19 : f32 to vector<1x128xf32>
    %47 = arith.mulf %45, %46 : vector<1x128xf32>
    %48 = arith.mulf %42, %42 : vector<1x128xf32>
    %49 = arith.subf %47, %48 : vector<1x128xf32>
    %cst_20 = arith.constant 0.000000e+00 : f32
    %50 = vector.broadcast %cst_20 : f32 to vector<1x128xf32>
    %51 = arith.maximumf %49, %50 : vector<1x128xf32>
    %cst_21 = arith.constant 9.99999974E-6 : f32
    %52 = vector.broadcast %cst_21 : f32 to vector<1x128xf32>
    %53 = arith.addf %51, %52 : vector<1x128xf32>
    %54 = math.rsqrt %53 : vector<1x128xf32>
    %55 = arith.mulf %37, %54 : vector<1x128xf32>
    %56 = arith.mulf %42, %55 : vector<1x128xf32>
    %57 = arith.subf %38, %56 : vector<1x128xf32>
    %58 = vector.broadcast %55 : vector<1x128xf32> to vector<8x128xf32>
    %59 = arith.mulf %36, %58 : vector<8x128xf32>
    %60 = vector.broadcast %57 : vector<1x128xf32> to vector<8x128xf32>
    %61 = arith.addf %59, %60 : vector<8x128xf32>
    %c0_22 = arith.constant 0 : index
    %c0_23 = arith.constant 0 : index
    %62 = vector.load %arg3[%c0_22, %c0_23] : memref<8x256xf32, #tpu.memory_space<vmem>>, vector<8x128xf32>
    tpu.vector_store %arg3[%c0_22, %c0_23], %61 {strides = array<i32>} : memref<8x256xf32, #tpu.memory_space<vmem>>, vector<8x128xf32>,
    %63 = arith.truncf %61 : vector<8x128xf32> to vector<8x128xbf16>
    %c2 = arith.constant 2 : index
    %c0_24 = arith.constant 0 : index
    %c0_25 = arith.constant 0 : index
    %64 = vector.load %arg1[%c2, %c0_24, %c0_25] : memref<4x128x128xbf16, #tpu.memory_space<vmem>>, vector<1x128x128xbf16>
    %65 = vector.shape_cast %64 : vector<1x128x128xbf16> to vector<128x128xbf16>
    %cst_26 = arith.constant dense<0.000000e+00> : vector<8x128xf32>
    %66 = tpu.matmul %63, %65, %cst_26 {dimension_numbers = #tpu.dot_dimension_numbers<[1], [0], [0], [1], [0, 0, 1, 1], [], []>} : vector<8x128xbf16>, vector<128x128xbf16>, vector<8x128xf32> -> vector<8x128xf32>
    %67 = vector.extract_strided_slice %0 {offsets = [4, 0], sizes = [1, 128], strides = [1, 1]} : vector<8x128xf32> to vector<1x128xf32>
    %68 = vector.extract_strided_slice %0 {offsets = [5, 0], sizes = [1, 128], strides = [1, 1]} : vector<8x128xf32> to vector<1x128xf32>
    %cst_27 = arith.constant dense<0.000000e+00> : vector<128xf32>
    %69 = vector.multi_reduction <add>, %66, %cst_27 [0] : vector<8x128xf32> to vector<128xf32>
    %70 = vector.shape_cast %69 : vector<128xf32> to vector<1x128xf32>
    %cst_28 = arith.constant 1.250000e-01 : f32
    %71 = vector.broadcast %cst_28 : f32 to vector<1x128xf32>
    %72 = arith.mulf %70, %71 : vector<1x128xf32>
    %73 = arith.mulf %66, %66 : vector<8x128xf32>
    %cst_29 = arith.constant dense<0.000000e+00> : vector<128xf32>
    %74 = vector.multi_reduction <add>, %73, %cst_29 [0] : vector<8x128xf32> to vector<128xf32>
    %75 = vector.shape_cast %74 : vector<128xf32> to vector<1x128xf32>
    %cst_30 = arith.constant 1.250000e-01 : f32
    %76 = vector.broadcast %cst_30 : f32 to vector<1x128xf32>
    %77 = arith.mulf %75, %76 : vector<1x128xf32>
    %78 = arith.mulf %72, %72 : vector<1x128xf32>
    %79 = arith.subf %77, %78 : vector<1x128xf32>
    %cst_31 = arith.constant 0.000000e+00 : f32
    %80 = vector.broadcast %cst_31 : f32 to vector<1x128xf32>
    %81 = arith.maximumf %79, %80 : vector<1x128xf32>
    %cst_32 = arith.constant 9.99999974E-6 : f32
    %82 = vector.broadcast %cst_32 : f32 to vector<1x128xf32>
    %83 = arith.addf %81, %82 : vector<1x128xf32>
    %84 = math.rsqrt %83 : vector<1x128xf32>
    %85 = arith.mulf %67, %84 : vector<1x128xf32>
    %86 = arith.mulf %72, %85 : vector<1x128xf32>
    %87 = arith.subf %68, %86 : vector<1x128xf32>
    %88 = vector.broadcast %85 : vector<1x128xf32> to vector<8x128xf32>
    %89 = arith.mulf %66, %88 : vector<8x128xf32>
    %90 = vector.broadcast %87 : vector<1x128xf32> to vector<8x128xf32>
    %91 = arith.addf %89, %90 : vector<8x128xf32>
    %cst_33 = arith.constant 0.000000e+00 : f32
    %92 = vector.broadcast %cst_33 : f32 to vector<8x128xf32>
    %93 = arith.maximumf %91, %92 : vector<8x128xf32>
    %94 = arith.truncf %93 : vector<8x128xf32> to vector<8x128xbf16>
    %c3 = arith.constant 3 : index
    %c0_34 = arith.constant 0 : index
    %c0_35 = arith.constant 0 : index
    %95 = vector.load %arg1[%c3, %c0_34, %c0_35] : memref<4x128x128xbf16, #tpu.memory_space<vmem>>, vector<1x128x128xbf16>
    %96 = vector.shape_cast %95 : vector<1x128x128xbf16> to vector<128x128xbf16>
    %cst_36 = arith.constant dense<0.000000e+00> : vector<8x128xf32>
    %97 = tpu.matmul %94, %96, %cst_36 {dimension_numbers = #tpu.dot_dimension_numbers<[1], [0], [0], [1], [0, 0, 1, 1], [], []>} : vector<8x128xbf16>, vector<128x128xbf16>, vector<8x128xf32> -> vector<8x128xf32>
    %98 = vector.extract_strided_slice %0 {offsets = [6, 0], sizes = [1, 128], strides = [1, 1]} : vector<8x128xf32> to vector<1x128xf32>
    %99 = vector.broadcast %98 : vector<1x128xf32> to vector<8x128xf32>
    %100 = arith.addf %97, %99 : vector<8x128xf32>
    %c0_37 = arith.constant 0 : index
    %c128 = arith.constant 128 : index
    %101 = vector.load %arg3[%c0_37, %c128] : memref<8x256xf32, #tpu.memory_space<vmem>>, vector<8x128xf32>
    tpu.vector_store %arg3[%c0_37, %c128], %100 {strides = array<i32>} : memref<8x256xf32, #tpu.memory_space<vmem>>, vector<8x128xf32>,
    return
  }
}

</mosaic_0001>

<llo_original>
// kernel: tpu_custom_call.1
$region0: #{tpu_custom_call.1}
  #allocation0 [shape = 'u32[]', space=smem, size = 0x4, offset = 0x4, fixed_abs, tag = 'smem constant byte address 0x4 - core index']
  #allocation1 [shape = 'u32[144,128]{1,0:T(1,128)}', space=vmem, size = 0x12000, scoped, tag = 'internal scratch']
  %s0 = inlined_call_operand.hbm [shape: f32[8,128], index: 0, kind: input, shape index: {}]
  %s1 = inlined_call_operand.hbm [shape: bf16[4,128,128], index: 1, kind: input, shape index: {}]
  %s2 = inlined_call_operand.hbm [shape: f32[8,128], index: 2, kind: input, shape index: {}]
  %s3 = inlined_call_operand.hbm [shape: f32[8,256], index: 3, kind: output, shape index: {}]
  %s4 = sld [smem:[#allocation0]]
  $region34: #{tpu_custom_call.1} parent=0
    _
  %s6 = ssub.s32 1, %s4
  %s7 = scalar_select 0, %s6, %s4
  $region1: #{tpu_custom_call.1} parent=0
    #allocation2 [shape = 'u8[4096]{0}', space=vmem, size = 0x1000, scoped, tag = 'input window, operand 0, single buffered']
    #allocation3 [shape = 's32[1]{0}', space=sflag, size = 0x4, scoped, tag = 'scoped memory for tpu_custom_call.1']
    #allocation4 [shape = 's32[1]{0}', space=sflag, size = 0x4, scoped, tag = 'scoped memory for tpu_custom_call.1']
    #allocation5 [shape = 'u8[131072]{0}', space=vmem, size = 0x20000, scoped, tag = 'input window, operand 1, single buffered']
    #allocation6 [shape = 's32[1]{0}', space=sflag, size = 0x4, scoped, tag = 'scoped memory for tpu_custom_call.1']
    #allocation7 [shape = 'u8[4096]{0}', space=vmem, size = 0x1000, scoped, tag = 'input window, operand 2, single buffered']
    #allocation8 [shape = 'u8[8192]{0}', space=vmem, size = 0x2000, scoped, tag = 'output window, operand 0, single buffered']
    %8 = vsyncpa [#allocation3], 0
    %9 = vsyncpa [#allocation6], 0
    %10 = vsyncpa [#allocation4], 0
    // Predicated region
    $region2: #{tpu_custom_call.1} parent=1 // pred_check
      _
    $region3: #{tpu_custom_call.1} parent=1 // pred_check_branch
      %12 = sbr.rel (0) target = $region5
    $region4: #{tpu_custom_call.1} parent=1 // pred_region
      %s14 = ssub.s32 128, 128
      %15 = vsyncadd [#allocation3], %s14
      %s17 = sshll.u32 [#allocation2], 4
      %s18 = int_to_ptr.vmem [resolvable:$true] %s17
      %20 = dma.hbm_to_vmem [thread:$0]  %s0, 128, %s18, [#allocation3]
    $region5: #{tpu_custom_call.1} parent=1 // pred_fallthru
      _
    // Predicated region
    $region6: #{tpu_custom_call.1} parent=1 // pred_check
      _
    $region7: #{tpu_custom_call.1} parent=1 // pred_check_branch
      %22 = sbr.rel (0) target = $region9
    $region8: #{tpu_custom_call.1} parent=1 // pred_region
      %s24 = ssub.s32 4096, 4096
      %25 = vsyncadd [#allocation6], %s24
      %s26 = sshll.u32 [#allocation5], 4
      %s27 = int_to_ptr.vmem [resolvable:$true] %s26
      %32 = dma.hbm_to_vmem [thread:$0]  %s1, 4096, %s27, [#allocation6], 64, 64, 4
    $region9: #{tpu_custom_call.1} parent=1 // pred_fallthru
      _
    // Predicated region
    $region10: #{tpu_custom_call.1} parent=1 // pred_check
      _
    $region11: #{tpu_custom_call.1} parent=1 // pred_check_branch
      %34 = sbr.rel (0) target = $region13
    $region12: #{tpu_custom_call.1} parent=1 // pred_region
      %s36 = ssub.s32 128, 128
      %37 = vsyncadd [#allocation6], %s36
      %s39 = sshll.u32 [#allocation7], 4
      %s40 = int_to_ptr.vmem [resolvable:$true] %s39
      %42 = dma.hbm_to_vmem [thread:$0]  %s2, 128, %s40, [#allocation6]
    $region13: #{tpu_custom_call.1} parent=1 // pred_fallthru
      _
    // Predicated region
    $region14: #{tpu_custom_call.1} parent=1 // pred_check
      _
    $region15: #{tpu_custom_call.1} parent=1 // pred_check_branch
      %44 = sbr.rel (0) target = $region17
    $region16: #{tpu_custom_call.1} parent=1 // pred_region
      %45 = dma.done [#allocation3], 128
    $region17: #{tpu_custom_call.1} parent=1 // pred_fallthru
      _
    // Predicated region
    $region18: #{tpu_custom_call.1} parent=1 // pred_check
      _
    $region19: #{tpu_custom_call.1} parent=1 // pred_check_branch
      %47 = sbr.rel (0) target = $region21
    $region20: #{tpu_custom_call.1} parent=1 // pred_region
      %48 = dma.done [#allocation6], 4096
    $region21: #{tpu_custom_call.1} parent=1 // pred_fallthru
      _
    // Predicated region
    $region22: #{tpu_custom_call.1} parent=1 // pred_check
      _
    $region23: #{tpu_custom_call.1} parent=1 // pred_check_branch
      %50 = sbr.rel (0) target = $region25
    $region24: #{tpu_custom_call.1} parent=1 // pred_region
      %51 = dma.done [#allocation6], 128
    $region25: #{tpu_custom_call.1} parent=1 // pred_fallthru
      _
    %v53 = vld [vmem:[#allocation7] sm:$0xff]
    %v54 = vld [vmem:[#allocation2] sm:$0xff]
    %v55 = vpack.c.bf16 %v54, %v54
    %v56 = vld [vmem:[#allocation5] sm:$0xf]
    %v57 = vld [vmem:[#allocation5 + $0x4] sm:$0xf]
    %v58 = vld [vmem:[#allocation5 + $0x8] sm:$0xf]
    %v59 = vld [vmem:[#allocation5 + $0xc] sm:$0xf]
    %v60 = vld [vmem:[#allocation5 + $0x10] sm:$0xf]
    %v61 = vld [vmem:[#allocation5 + $0x14] sm:$0xf]
    %v62 = vld [vmem:[#allocation5 + $0x18] sm:$0xf]
    %v63 = vld [vmem:[#allocation5 + $0x1c] sm:$0xf]
    %v64 = vld [vmem:[#allocation5 + $0x20] sm:$0xf]
    %v65 = vld [vmem:[#allocation5 + $0x24] sm:$0xf]
    %v66 = vld [vmem:[#allocation5 + $0x28] sm:$0xf]
    %v67 = vld [vmem:[#allocation5 + $0x2c] sm:$0xf]
    %v68 = vld [vmem:[#allocation5 + $0x30] sm:$0xf]
    %v69 = vld [vmem:[#allocation5 + $0x34] sm:$0xf]
    %v70 = vld [vmem:[#allocation5 + $0x38] sm:$0xf]
    %v71 = vld [vmem:[#allocation5 + $0x3c] sm:$0xf]
    %v88 = vunpack.c.l.b16 %v56
    %v89 = vunpack.c.l.b16 %v57
    %v90 = vunpack.c.l.b16 %v58
    %v91 = vunpack.c.l.b16 %v59
    %v92 = vunpack.c.l.b16 %v60
    %v93 = vunpack.c.l.b16 %v61
    %v94 = vunpack.c.l.b16 %v62
    %v95 = vunpack.c.l.b16 %v63
    %v96 = vunpack.c.l.b16 %v64
    %v97 = vunpack.c.l.b16 %v65
    %v98 = vunpack.c.l.b16 %v66
    %v99 = vunpack.c.l.b16 %v67
    %v100 = vunpack.c.l.b16 %v68
    %v101 = vunpack.c.l.b16 %v69
    %v102 = vunpack.c.l.b16 %v70
    %v103 = vunpack.c.l.b16 %v71
    %v104 = vpack.c.b16 %v89, %v88
    %v105 = vpack.c.b16 %v91, %v90
    %v106 = vpack.c.b16 %v93, %v92
    %v107 = vpack.c.b16 %v95, %v94
    %v108 = vpack.c.b16 %v97, %v96
    %v109 = vpack.c.b16 %v99, %v98
    %v110 = vpack.c.b16 %v101, %v100
    %v111 = vpack.c.b16 %v103, %v102
    %120 = vmatprep.subr.bf16.mxu0 0
    %121 = vmatpush1.bf16.msra.mxu0 %v111
    %122 = vmatprep.subr.bf16.mxu0 0
    %123 = vmatpush1.bf16.msra.mxu0 %v110
    %124 = vmatprep.subr.bf16.mxu0 0
    %125 = vmatpush1.bf16.msra.mxu0 %v109
    %126 = vmatprep.subr.bf16.mxu0 0
    %127 = vmatpush1.bf16.msra.mxu0 %v108
    %128 = vmatprep.subr.bf16.mxu0 0
    %129 = vmatpush1.bf16.msra.mxu0 %v107
    %130 = vmatprep.subr.bf16.mxu0 0
    %131 = vmatpush1.bf16.msra.mxu0 %v106
    %132 = vmatprep.subr.bf16.mxu0 0
    %133 = vmatpush1.bf16.msra.mxu0 %v105
    %134 = vmatprep.subr.bf16.mxu0 0
    %135 = vmatpush1.bf16.msra.mxu0 %v104
    %136 = vmatprep.subr.bf16.mxu0 0
    %137 = vmatpush2.bf16.msra.mxu0 0
    %138 = vmatprep.subr.bf16.mxu0 0
    %139 = vmatpush2.bf16.msra.mxu0 0
    %140 = vmatprep.subr.bf16.mxu0 0
    %141 = vmatpush2.bf16.msra.mxu0 0
    %142 = vmatprep.subr.bf16.mxu0 0
    %143 = vmatpush2.bf16.msra.mxu0 0
    %144 = vmatprep.subr.bf16.mxu0 0
    %145 = vmatpush2.bf16.msra.mxu0 0
    %146 = vmatprep.subr.bf16.mxu0 0
    %147 = vmatpush2.bf16.msra.mxu0 0
    %148 = vmatprep.subr.bf16.mxu0 0
    %149 = vmatpush2.bf16.msra.mxu0 0
    %150 = vmatprep.subr.bf16.mxu0 0
    %151 = vmatpush2.bf16.msra.mxu0 0
    %152 = vmatprep.mubr.bf16.mxu0 0
    %153 = vmatmul.mubr.bf16.gmra.mxu0 %v55
    %v154 = vpop.f32.mrf.mxu0
    %v155 = vadd.f32 0.0, %v154
    %v156 = vpop.f32.mrf.mxu0
    %v157 = vpop.f32.mrf.mxu0
    %v158 = vpop.f32.mrf.mxu0
    %159 = vdwg.mxu0
    %v160 = vrot.slane %v155, 4
    %v161 = vadd.f32 %v155, %v160
    %v162 = vrot.slane %v161, 2
    %v163 = vadd.f32 %v161, %v162
    %v164 = vrot.slane %v163, 1
    %v165 = vadd.f32 %v163, %v164
    %v166 = vmul.f32 %v165, 0.125
    %v167 = vmul.f32 %v155, %v155
    %v168 = vrot.slane %v167, 4
    %v169 = vadd.f32 %v167, %v168
    %v170 = vrot.slane %v169, 2
    %v171 = vadd.f32 %v169, %v170
    %v172 = vrot.slane %v171, 1
    %v173 = vadd.f32 %v171, %v172
    %v174 = vmul.f32 %v173, 0.125
    %v175 = vmul.f32 %v166, %v166
    %v176 = vsub.f32 %v174, %v175
    %v177 = vmax.f32 %v176, 0.0
    %v178 = vadd.f32 %v177, 1e-05
    %v179 = vrsqrt.pop %v178
    %v180 = vmul.f32 %v53, %v179
    %v181 = vmul.f32 %v166, %v180
    %v183 = vrot.slane %v181, 7
    %v185 = vsub.f32 %v53, %v183
    %v186 = vlaneseq
    %v187 = vshrl.u32 %v186, 7
    %v188 = vsub.s32 0, %v187
    %v189 = vrot.slane %v180, %v188
    %v190 = vmul.f32 %v155, %v189
    %v191 = vlaneseq
    %v192 = vshrl.u32 %v191, 7
    %v193 = vsub.s32 1, %v192
    %v194 = vrot.slane %v185, %v193
    %v195 = vadd.f32 %v190, %v194
    %v196 = vmax.f32 %v195, 0.0
    %v197 = vpack.c.bf16 %v196, %v196
    %s198 = scalar_lea.vmem [#allocation5], 64
    %v199 = vld [vmem:[%s198] sm:$0xf]
    %v200 = vld [vmem:[%s198 + $0x4] sm:$0xf]
    %v201 = vld [vmem:[%s198 + $0x8] sm:$0xf]
    %v202 = vld [vmem:[%s198 + $0xc] sm:$0xf]
    %v203 = vld [vmem:[%s198 + $0x10] sm:$0xf]
    %v204 = vld [vmem:[%s198 + $0x14] sm:$0xf]
    %v205 = vld [vmem:[%s198 + $0x18] sm:$0xf]
    %v206 = vld [vmem:[%s198 + $0x1c] sm:$0xf]
    %v207 = vld [vmem:[%s198 + $0x20] sm:$0xf]
    %v208 = vld [vmem:[%s198 + $0x24] sm:$0xf]
    %v209 = vld [vmem:[%s198 + $0x28] sm:$0xf]
    %v210 = vld [vmem:[%s198 + $0x2c] sm:$0xf]
    %v211 = vld [vmem:[%s198 + $0x30] sm:$0xf]
    %v212 = vld [vmem:[%s198 + $0x34] sm:$0xf]
    %v213 = vld [vmem:[%s198 + $0x38] sm:$0xf]
    %v214 = vld [vmem:[%s198 + $0x3c] sm:$0xf]
    %v231 = vunpack.c.l.b16 %v199
    %v232 = vunpack.c.l.b16 %v200
    %v233 = vunpack.c.l.b16 %v201
    %v234 = vunpack.c.l.b16 %v202
    %v235 = vunpack.c.l.b16 %v203
    %v236 = vunpack.c.l.b16 %v204
    %v237 = vunpack.c.l.b16 %v205
    %v238 = vunpack.c.l.b16 %v206
    %v239 = vunpack.c.l.b16 %v207
    %v240 = vunpack.c.l.b16 %v208
    %v241 = vunpack.c.l.b16 %v209
    %v242 = vunpack.c.l.b16 %v210
    %v243 = vunpack.c.l.b16 %v211
    %v244 = vunpack.c.l.b16 %v212
    %v245 = vunpack.c.l.b16 %v213
    %v246 = vunpack.c.l.b16 %v214
    %v247 = vpack.c.b16 %v232, %v231
    %v248 = vpack.c.b16 %v234, %v233
    %v249 = vpack.c.b16 %v236, %v235
    %v250 = vpack.c.b16 %v238, %v237
    %v251 = vpack.c.b16 %v240, %v239
    %v252 = vpack.c.b16 %v242, %v241
    %v253 = vpack.c.b16 %v244, %v243
    %v254 = vpack.c.b16 %v246, %v245
    %263 = vmatprep.subr.bf16.mxu0 0
    %264 = vmatpush1.bf16.msra.mxu0 %v254
    %265 = vmatprep.subr.bf16.mxu0 0
    %266 = vmatpush1.bf16.msra.mxu0 %v253
    %267 = vmatprep.subr.bf16.mxu0 0
    %268 = vmatpush1.bf16.msra.mxu0 %v252
    %269 = vmatprep.subr.bf16.mxu0 0
    %270 = vmatpush1.bf16.msra.mxu0 %v251
    %271 = vmatprep.subr.bf16.mxu0 0
    %272 = vmatpush1.bf16.msra.mxu0 %v250
    %273 = vmatprep.subr.bf16.mxu0 0
    %274 = vmatpush1.bf16.msra.mxu0 %v249
    %275 = vmatprep.subr.bf16.mxu0 0
    %276 = vmatpush1.bf16.msra.mxu0 %v248
    %277 = vmatprep.subr.bf16.mxu0 0
    %278 = vmatpush1.bf16.msra.mxu0 %v247
    %279 = vmatprep.subr.bf16.mxu0 0
    %280 = vmatpush2.bf16.msra.mxu0 0
    %281 = vmatprep.subr.bf16.mxu0 0
    %282 = vmatpush2.bf16.msra.mxu0 0
    %283 = vmatprep.subr.bf16.mxu0 0
    %284 = vmatpush2.bf16.msra.mxu0 0
    %285 = vmatprep.subr.bf16.mxu0 0
    %286 = vmatpush2.bf16.msra.mxu0 0
    %287 = vmatprep.subr.bf16.mxu0 0
    %288 = vmatpush2.bf16.msra.mxu0 0
    %289 = vmatprep.subr.bf16.mxu0 0
    %290 = vmatpush2.bf16.msra.mxu0 0
    %291 = vmatprep.subr.bf16.mxu0 0
    %292 = vmatpush2.bf16.msra.mxu0 0
    %293 = vmatprep.subr.bf16.mxu0 0
    %294 = vmatpush2.bf16.msra.mxu0 0
    %295 = vmatprep.mubr.bf16.mxu0 0
    %296 = vmatmul.mubr.bf16.gmra.mxu0 %v197
    %v297 = vpop.f32.mrf.mxu0
    %v298 = vadd.f32 0.0, %v297
    %v299 = vpop.f32.mrf.mxu0
    %v300 = vpop.f32.mrf.mxu0
    %v301 = vpop.f32.mrf.mxu0
    %302 = vdwg.mxu0
    %v303 = vrot.slane %v298, 4
    %v304 = vadd.f32 %v298, %v303
    %v305 = vrot.slane %v304, 2
    %v306 = vadd.f32 %v304, %v305
    %v307 = vrot.slane %v306, 1
    %v308 = vadd.f32 %v306, %v307
    %v309 = vmul.f32 %v308, 0.125
    %v310 = vmul.f32 %v298, %v298
    %v311 = vrot.slane %v310, 4
    %v312 = vadd.f32 %v310, %v311
    %v313 = vrot.slane %v312, 2
    %v314 = vadd.f32 %v312, %v313
    %v315 = vrot.slane %v314, 1
    %v316 = vadd.f32 %v314, %v315
    %v317 = vmul.f32 %v316, 0.125
    %v318 = vmul.f32 %v309, %v309
    %v319 = vsub.f32 %v317, %v318
    %v320 = vmax.f32 %v319, 0.0
    %v321 = vadd.f32 %v320, 1e-05
    %v322 = vrsqrt.pop %v321
    %v323 = vmul.f32 %v53, %v322
    %v324 = vmul.f32 %v309, %v323
    %v326 = vrot.slane %v324, 7
    %v328 = vsub.f32 %v53, %v326
    %v329 = vlaneseq
    %v330 = vshrl.u32 %v329, 7
    %v331 = vsub.s32 2, %v330
    %v332 = vrot.slane %v323, %v331
    %v333 = vmul.f32 %v298, %v332
    %v334 = vlaneseq
    %v335 = vshrl.u32 %v334, 7
    %v336 = vsub.s32 3, %v335
    %v337 = vrot.slane %v328, %v336
    %v338 = vadd.f32 %v333, %v337
    %339 = vst [vmem:[#allocation8] sm:$0xff] %v338
    %v340 = vpack.c.bf16 %v338, %v338
    %s341 = scalar_lea.vmem [#allocation5], 128
    %v342 = vld [vmem:[%s341] sm:$0xf]
    %v343 = vld [vmem:[%s341 + $0x4] sm:$0xf]
    %v344 = vld [vmem:[%s341 + $0x8] sm:$0xf]
    %v345 = vld [vmem:[%s341 + $0xc] sm:$0xf]
    %v346 = vld [vmem:[%s341 + $0x10] sm:$0xf]
    %v347 = vld [vmem:[%s341 + $0x14] sm:$0xf]
    %v348 = vld [vmem:[%s341 + $0x18] sm:$0xf]
    %v349 = vld [vmem:[%s341 + $0x1c] sm:$0xf]
    %v350 = vld [vmem:[%s341 + $0x20] sm:$0xf]
    %v351 = vld [vmem:[%s341 + $0x24] sm:$0xf]
    %v352 = vld [vmem:[%s341 + $0x28] sm:$0xf]
    %v353 = vld [vmem:[%s341 + $0x2c] sm:$0xf]
    %v354 = vld [vmem:[%s341 + $0x30] sm:$0xf]
    %v355 = vld [vmem:[%s341 + $0x34] sm:$0xf]
    %v356 = vld [vmem:[%s341 + $0x38] sm:$0xf]
    %v357 = vld [vmem:[%s341 + $0x3c] sm:$0xf]
    %v374 = vunpack.c.l.b16 %v342
    %v375 = vunpack.c.l.b16 %v343
    %v376 = vunpack.c.l.b16 %v344
    %v377 = vunpack.c.l.b16 %v345
    %v378 = vunpack.c.l.b16 %v346
    %v379 = vunpack.c.l.b16 %v347
    %v380 = vunpack.c.l.b16 %v348
    %v381 = vunpack.c.l.b16 %v349
    %v382 = vunpack.c.l.b16 %v350
    %v383 = vunpack.c.l.b16 %v351
    %v384 = vunpack.c.l.b16 %v352
    %v385 = vunpack.c.l.b16 %v353
    %v386 = vunpack.c.l.b16 %v354
    %v387 = vunpack.c.l.b16 %v355
    %v388 = vunpack.c.l.b16 %v356
    %v389 = vunpack.c.l.b16 %v357
    %v390 = vpack.c.b16 %v375, %v374
    %v391 = vpack.c.b16 %v377, %v376
    %v392 = vpack.c.b16 %v379, %v378
    %v393 = vpack.c.b16 %v381, %v380
    %v394 = vpack.c.b16 %v383, %v382
    %v395 = vpack.c.b16 %v385, %v384
    %v396 = vpack.c.b16 %v387, %v386
    %v397 = vpack.c.b16 %v389, %v388
    %406 = vmatprep.subr.bf16.mxu0 0
    %407 = vmatpush1.bf16.msra.mxu0 %v397
    %408 = vmatprep.subr.bf16.mxu0 0
    %409 = vmatpush1.bf16.msra.mxu0 %v396
    %410 = vmatprep.subr.bf16.mxu0 0
    %411 = vmatpush1.bf16.msra.mxu0 %v395
    %412 = vmatprep.subr.bf16.mxu0 0
    %413 = vmatpush1.bf16.msra.mxu0 %v394
    %414 = vmatprep.subr.bf16.mxu0 0
    %415 = vmatpush1.bf16.msra.mxu0 %v393
    %416 = vmatprep.subr.bf16.mxu0 0
    %417 = vmatpush1.bf16.msra.mxu0 %v392
    %418 = vmatprep.subr.bf16.mxu0 0
    %419 = vmatpush1.bf16.msra.mxu0 %v391
    %420 = vmatprep.subr.bf16.mxu0 0
    %421 = vmatpush1.bf16.msra.mxu0 %v390
    %422 = vmatprep.subr.bf16.mxu0 0
    %423 = vmatpush2.bf16.msra.mxu0 0
    %424 = vmatprep.subr.bf16.mxu0 0
    %425 = vmatpush2.bf16.msra.mxu0 0
    %426 = vmatprep.subr.bf16.mxu0 0
    %427 = vmatpush2.bf16.msra.mxu0 0
    %428 = vmatprep.subr.bf16.mxu0 0
    %429 = vmatpush2.bf16.msra.mxu0 0
    %430 = vmatprep.subr.bf16.mxu0 0
    %431 = vmatpush2.bf16.msra.mxu0 0
    %432 = vmatprep.subr.bf16.mxu0 0
    %433 = vmatpush2.bf16.msra.mxu0 0
    %434 = vmatprep.subr.bf16.mxu0 0
    %435 = vmatpush2.bf16.msra.mxu0 0
    %436 = vmatprep.subr.bf16.mxu0 0
    %437 = vmatpush2.bf16.msra.mxu0 0
    %438 = vmatprep.mubr.bf16.mxu0 0
    %439 = vmatmul.mubr.bf16.gmra.mxu0 %v340
    %v440 = vpop.f32.mrf.mxu0
    %v441 = vadd.f32 0.0, %v440
    %v442 = vpop.f32.mrf.mxu0
    %v443 = vpop.f32.mrf.mxu0
    %v444 = vpop.f32.mrf.mxu0
    %445 = vdwg.mxu0
    %v446 = vrot.slane %v441, 4
    %v447 = vadd.f32 %v441, %v446
    %v448 = vrot.slane %v447, 2
    %v449 = vadd.f32 %v447, %v448
    %v450 = vrot.slane %v449, 1
    %v451 = vadd.f32 %v449, %v450
    %v452 = vmul.f32 %v451, 0.125
    %v453 = vmul.f32 %v441, %v441
    %v454 = vrot.slane %v453, 4
    %v455 = vadd.f32 %v453, %v454
    %v456 = vrot.slane %v455, 2
    %v457 = vadd.f32 %v455, %v456
    %v458 = vrot.slane %v457, 1
    %v459 = vadd.f32 %v457, %v458
    %v460 = vmul.f32 %v459, 0.125
    %v461 = vmul.f32 %v452, %v452
    %v462 = vsub.f32 %v460, %v461
    %v463 = vmax.f32 %v462, 0.0
    %v464 = vadd.f32 %v463, 1e-05
    %v465 = vrsqrt.pop %v464
    %v466 = vmul.f32 %v53, %v465
    %v467 = vmul.f32 %v452, %v466
    %v469 = vrot.slane %v467, 7
    %v471 = vsub.f32 %v53, %v469
    %v472 = vlaneseq
    %v473 = vshrl.u32 %v472, 7
    %v474 = vsub.s32 4, %v473
    %v475 = vrot.slane %v466, %v474
    %v476 = vmul.f32 %v441, %v475
    %v477 = vlaneseq
    %v478 = vshrl.u32 %v477, 7
    %v479 = vsub.s32 5, %v478
    %v480 = vrot.slane %v471, %v479
    %v481 = vadd.f32 %v476, %v480
    %v482 = vmax.f32 %v481, 0.0
    %v483 = vpack.c.bf16 %v482, %v482
    %s484 = scalar_lea.vmem [#allocation5], 192
    %v485 = vld [vmem:[%s484] sm:$0xf]
    %v486 = vld [vmem:[%s484 + $0x4] sm:$0xf]
    %v487 = vld [vmem:[%s484 + $0x8] sm:$0xf]
    %v488 = vld [vmem:[%s484 + $0xc] sm:$0xf]
    %v489 = vld [vmem:[%s484 + $0x10] sm:$0xf]
    %v490 = vld [vmem:[%s484 + $0x14] sm:$0xf]
    %v491 = vld [vmem:[%s484 + $0x18] sm:$0xf]
    %v492 = vld [vmem:[%s484 + $0x1c] sm:$0xf]
    %v493 = vld [vmem:[%s484 + $0x20] sm:$0xf]
    %v494 = vld [vmem:[%s484 + $0x24] sm:$0xf]
    %v495 = vld [vmem:[%s484 + $0x28] sm:$0xf]
    %v496 = vld [vmem:[%s484 + $0x2c] sm:$0xf]
    %v497 = vld [vmem:[%s484 + $0x30] sm:$0xf]
    %v498 = vld [vmem:[%s484 + $0x34] sm:$0xf]
    %v499 = vld [vmem:[%s484 + $0x38] sm:$0xf]
    %v500 = vld [vmem:[%s484 + $0x3c] sm:$0xf]
    %v501 = vlaneseq
    %v502 = vshrl.u32 %v501, 7
    %v503 = vsub.s32 6, %v502
    %v504 = vrot.slane %v53, %v503
    %v521 = vunpack.c.l.b16 %v485
    %v522 = vunpack.c.l.b16 %v486
    %v523 = vunpack.c.l.b16 %v487
    %v524 = vunpack.c.l.b16 %v488
    %v525 = vunpack.c.l.b16 %v489
    %v526 = vunpack.c.l.b16 %v490
    %v527 = vunpack.c.l.b16 %v491
    %v528 = vunpack.c.l.b16 %v492
    %v529 = vunpack.c.l.b16 %v493
    %v530 = vunpack.c.l.b16 %v494
    %v531 = vunpack.c.l.b16 %v495
    %v532 = vunpack.c.l.b16 %v496
    %v533 = vunpack.c.l.b16 %v497
    %v534 = vunpack.c.l.b16 %v498
    %v535 = vunpack.c.l.b16 %v499
    %v536 = vunpack.c.l.b16 %v500
    %v537 = vpack.c.b16 %v522, %v521
    %v538 = vpack.c.b16 %v524, %v523
    %v539 = vpack.c.b16 %v526, %v525
    %v540 = vpack.c.b16 %v528, %v527
    %v541 = vpack.c.b16 %v530, %v529
    %v542 = vpack.c.b16 %v532, %v531
    %v543 = vpack.c.b16 %v534, %v533
    %v544 = vpack.c.b16 %v536, %v535
    %553 = vmatprep.subr.bf16.mxu0 0
    %554 = vmatpush1.bf16.msra.mxu0 %v544
    %555 = vmatprep.subr.bf16.mxu0 0
    %556 = vmatpush1.bf16.msra.mxu0 %v543
    %557 = vmatprep.subr.bf16.mxu0 0
    %558 = vmatpush1.bf16.msra.mxu0 %v542
    %559 = vmatprep.subr.bf16.mxu0 0
    %560 = vmatpush1.bf16.msra.mxu0 %v541
    %561 = vmatprep.subr.bf16.mxu0 0
    %562 = vmatpush1.bf16.msra.mxu0 %v540
    %563 = vmatprep.subr.bf16.mxu0 0
    %564 = vmatpush1.bf16.msra.mxu0 %v539
    %565 = vmatprep.subr.bf16.mxu0 0
    %566 = vmatpush1.bf16.msra.mxu0 %v538
    %567 = vmatprep.subr.bf16.mxu0 0
    %568 = vmatpush1.bf16.msra.mxu0 %v537
    %569 = vmatprep.subr.bf16.mxu0 0
    %570 = vmatpush2.bf16.msra.mxu0 0
    %571 = vmatprep.subr.bf16.mxu0 0
    %572 = vmatpush2.bf16.msra.mxu0 0
    %573 = vmatprep.subr.bf16.mxu0 0
    %574 = vmatpush2.bf16.msra.mxu0 0
    %575 = vmatprep.subr.bf16.mxu0 0
    %576 = vmatpush2.bf16.msra.mxu0 0
    %577 = vmatprep.subr.bf16.mxu0 0
    %578 = vmatpush2.bf16.msra.mxu0 0
    %579 = vmatprep.subr.bf16.mxu0 0
    %580 = vmatpush2.bf16.msra.mxu0 0
    %581 = vmatprep.subr.bf16.mxu0 0
    %582 = vmatpush2.bf16.msra.mxu0 0
    %583 = vmatprep.subr.bf16.mxu0 0
    %584 = vmatpush2.bf16.msra.mxu0 0
    %585 = vmatprep.mubr.bf16.mxu0 0
    %586 = vmatmul.mubr.bf16.gmra.mxu0 %v483
    %v587 = vpop.f32.mrf.mxu0
    %v588 = vadd.f32 %v504, %v587
    %v589 = vpop.f32.mrf.mxu0
    %v590 = vpop.f32.mrf.mxu0
    %v591 = vpop.f32.mrf.mxu0
    %592 = vdwg.mxu0
    %593 = vst [vmem:[#allocation8 + $0x8] sm:$0xff] %v588
    // Predicated region
    $region26: #{tpu_custom_call.1} parent=1 // pred_check
      _
    $region27: #{tpu_custom_call.1} parent=1 // pred_check_branch
      %595 = sbr.rel (0) target = $region29
    $region28: #{tpu_custom_call.1} parent=1 // pred_region
      %s597 = ssub.s32 256, 256
      %598 = vsyncadd [#allocation4], %s597
      %s600 = sshll.u32 [#allocation8], 4
      %s601 = int_to_ptr.vmem [resolvable:$true] %s600
      %603 = dma.vmem_to_hbm [thread:$0]  %s601, 256, %s3, [#allocation4]
    $region29: #{tpu_custom_call.1} parent=1 // pred_fallthru
      _
    // Predicated region
    $region30: #{tpu_custom_call.1} parent=1 // pred_check
      _
    $region31: #{tpu_custom_call.1} parent=1 // pred_check_branch
      %605 = sbr.rel (0) target = $region33
    $region32: #{tpu_custom_call.1} parent=1 // pred_region
      %606 = dma.done [#allocation4], 256
    $region33: #{tpu_custom_call.1} parent=1 // pred_fallthru
      _
    %607 = vsyncpa [#allocation3], 1
    %608 = vsyncpa [#allocation6], 1
    %609 = vsyncpa [#allocation4], 1

</llo_original>
